<compile_context>
chip_gen: v5e
topology: v5e:2x2
jax: 0.10.0
libtpu: 0.0.40
codegen_flags: <defaults>
</compile_context>

<pallas_src>
import math
import functools

import jax
import jax.numpy as jnp
from jax.experimental import pallas as pl
from jax.experimental.pallas import tpu as pltpu


_VMEM_LIMIT_BYTES = 32 * 1024 * 1024   # safe scoped-VMEM budget on v5e/v6e/v7x
_TARGET_TILE_BYTES = 1 << 20           # ~1 MiB per f32 buffer per stream


def _margin_constants(margin):
    return (math.cos(margin),
            math.sin(margin),
            math.cos(math.pi - margin),
            math.sin(math.pi - margin) * margin)


def _aam_math(raw, *, cos_m, sin_m, th, mm, easy_margin):
    """Shared elementwise AAM math (f32)."""
    cosine = jnp.clip(raw.astype(jnp.float32), -1.0 + 1e-07, 1.0 - 1e-07)
    sine = jnp.sqrt(1.0 - cosine * cosine)
    phi = cosine * cos_m - sine * sin_m
    if easy_margin:
        phi = jnp.where(cosine > 0.0, phi, cosine)
    else:
        phi = jnp.where(cosine > th, phi, cosine - mm)
    return cosine, phi


def _aam_dense_kernel(out_ref, tgt_ref, pred_ref, *,
                      cos_m, sin_m, th, mm, scale, easy_margin):
    cosine, phi = _aam_math(out_ref[...], cos_m=cos_m, sin_m=sin_m,
                            th=th, mm=mm, easy_margin=easy_margin)
    t = tgt_ref[...].astype(jnp.float32)
    # targets*phi + (1-targets)*cosine == cosine + targets*(phi - cosine)
    pred_ref[...] = scale * cosine + t * (scale * (phi - cosine))


def _aam_onehot_kernel(out_ref, lbl_ref, pred_ref, *,
                       cos_m, sin_m, th, mm, scale, easy_margin):
    cosine, phi = _aam_math(out_ref[...], cos_m=cos_m, sin_m=sin_m,
                            th=th, mm=mm, easy_margin=easy_margin)
    # Build the one-hot mask in-kernel: no dense [N, C] targets HBM stream.
    cols = jax.lax.broadcasted_iota(jnp.int32, cosine.shape, 1)
    mask = (cols == lbl_ref[...]).astype(jnp.float32)   # lbl_ref is (rows, 1)
    pred_ref[...] = scale * cosine + mask * (scale * (phi - cosine))


def _pick_lane_width(total, fallback_width):
    """Largest lane-dense width (multiple of 128) that evenly divides N*C."""
    for w in (1024, 512, 256, 128):
        if total % w == 0:
            return w
    # Fallback: keep the original last dim (== full array dim, always legal).
    return fallback_width


def _pick_block_rows(rows, width, requested=None):
    """Block rows: multiple of 8, or the full row extent (both legal)."""
    if requested is not None:
        br = min(int(requested), rows)
        if br != rows:
            br = max(8, br - (br % 8))
            br = min(br, rows)
        return br
    target = max(8, (_TARGET_TILE_BYTES // (width * 4)) // 8 * 8)
    return rows if rows <= target else target


def _compiler_params():
    return pltpu.CompilerParams(
        dimension_semantics=("parallel",),
        vmem_limit_bytes=_VMEM_LIMIT_BYTES,
    )


def additive_angular_margin(outputs, targets, *, margin=0.0, scale=1.0,
                            easy_margin=False, block_rows=None):
    """Module-faithful path: dense targets [N, C] (may be soft labels).

    outputs, targets: [N, C]; returns float32 [N, C] (matches `.float()`).
    """
    assert outputs.ndim == 2 and outputs.shape == targets.shape
    N, C = outputs.shape
    total = N * C

    # Lane-dense flattened view for this purely elementwise op.
    width = _pick_lane_width(total, C)
    rows = total // width
    out2 = outputs.reshape(rows, width)
    tgt2 = targets.reshape(rows, width)

    br = _pick_block_rows(rows, width, block_rows)
    grid = (pl.cdiv(rows, br),)

    cos_m, sin_m, th, mm = _margin_constants(margin)
    kernel = functools.partial(
        _aam_dense_kernel, cos_m=cos_m, sin_m=sin_m, th=th, mm=mm,
        scale=float(scale), easy_margin=bool(easy_margin))

    spec = pl.BlockSpec((br, width), lambda i: (i, 0))
    result = pl.pallas_call(
        kernel,
        out_shape=jax.ShapeDtypeStruct((rows, width), jnp.float32),
        grid_spec=pltpu.PrefetchScalarGridSpec(
            num_scalar_prefetch=0,
            grid=grid,
            in_specs=[spec, spec],
            out_specs=spec,
        ),
        compiler_params=_compiler_params(),
    )(out2, tgt2)
    return result.reshape(N, C)


def additive_angular_margin_onehot(outputs, labels, *, margin=0.0, scale=1.0,
                                   easy_margin=False, block_rows=None):
    """Fast path for one-hot targets: pass integer class labels [N] instead of
    a dense [N, C] targets array; the mask is built in-kernel (≈33% less HBM
    traffic). Equivalent to the dense path with targets = one_hot(labels, C).
    """
    assert outputs.ndim == 2
    N, C = outputs.shape
    assert labels.shape == (N,)
    labels2 = labels.astype(jnp.int32).reshape(N, 1)

    br = _pick_block_rows(N, C, block_rows)
    grid = (pl.cdiv(N, br),)

    cos_m, sin_m, th, mm = _margin_constants(margin)
    kernel = functools.partial(
        _aam_onehot_kernel, cos_m=cos_m, sin_m=sin_m, th=th, mm=mm,
        scale=float(scale), easy_margin=bool(easy_margin))

    out_spec = pl.BlockSpec((br, C), lambda i: (i, 0))
    lbl_spec = pl.BlockSpec((br, 1), lambda i: (i, 0))
    return pl.pallas_call(
        kernel,
        out_shape=jax.ShapeDtypeStruct((N, C), jnp.float32),
        grid_spec=pltpu.PrefetchScalarGridSpec(
            num_scalar_prefetch=0,
            grid=grid,
            in_specs=[out_spec, lbl_spec],
            out_specs=out_spec,
        ),
        compiler_params=_compiler_params(),
    )(outputs, labels2)


def _reference(outputs, targets, *, margin=0.0, scale=1.0, easy_margin=False):
    cos_m, sin_m, th, mm = _margin_constants(margin)
    cosine = jnp.clip(outputs.astype(jnp.float32), -1 + 1e-07, 1 - 1e-07)
    sine = jnp.sqrt(1.0 - cosine ** 2)
    phi = cosine * cos_m - sine * sin_m
    if easy_margin:
        phi = jnp.where(cosine > 0, phi, cosine)
    else:
        phi = jnp.where(cosine > th, phi, cosine - mm)
    t = targets.astype(jnp.float32)
    return scale * (t * phi + (1.0 - t) * cosine)


if __name__ == "__main__":
    key = jax.random.PRNGKey(0)

    def make_inputs(k, N, C, dtype=jnp.float32):
        k1, k2 = jax.random.split(k)
        # cosine-similarity-like inputs in [-1, 1]
        out = jnp.tanh(jax.random.normal(k1, (N, C), dtype=jnp.float32))
        out = out.astype(dtype)
        labels = jax.random.randint(k2, (N,), 0, C)
        targets = jax.nn.one_hot(labels, C, dtype=jnp.float32)
        return out, labels, targets

    margin, scale = 0.2, 30.0
    k1, k2, k3, k4, k5 = jax.random.split(key, 5)

    # 1) Lane-dense flattened path (N*C divisible by 1024).
    o, l, t = make_inputs(k1, 8, 512)
    pred = jax.block_until_ready(
        additive_angular_margin(o, t, margin=margin, scale=scale))
    ref = _reference(o, t, margin=margin, scale=scale)
    assert pred.shape == (8, 512) and pred.dtype == jnp.float32
    assert jnp.allclose(pred, ref, atol=1e-4, rtol=1e-4), "dense path mismatch"

    # 2) Fallback path (C not a multiple of 128), easy_margin=True.
    o, l, t = make_inputs(k2, 8, 100)
    pred = jax.block_until_ready(
        additive_angular_margin(o, t, margin=margin, scale=scale,
                                easy_margin=True))
    ref = _reference(o, t, margin=margin, scale=scale, easy_margin=True)
    assert jnp.allclose(pred, ref, atol=1e-4, rtol=1e-4), "fallback mismatch"

    # 3) Multi-tile pipelined path with a partial last block.
    o, l, t = make_inputs(k3, 64, 200)
    pred = jax.block_until_ready(
        additive_angular_margin(o, t, margin=margin, scale=scale,
                                block_rows=8))
    ref = _reference(o, t, margin=margin, scale=scale)
    assert jnp.allclose(pred, ref, atol=1e-4, rtol=1e-4), "tiled mismatch"

    # 4) bf16 inputs (upcast in-register inside the kernel).
    o, l, t = make_inputs(k4, 16, 512, dtype=jnp.bfloat16)
    pred = jax.block_until_ready(
        additive_angular_margin(o, t, margin=margin, scale=scale))
    ref = _reference(o, t, margin=margin, scale=scale)
    assert jnp.allclose(pred, ref, atol=1e-4, rtol=1e-4), "bf16 mismatch"

    # 5) One-hot fast path: integer labels, no dense targets HBM stream.
    o, l, t = make_inputs(k5, 8, 512)
    pred = jax.block_until_ready(
        additive_angular_margin_onehot(o, l, margin=margin, scale=scale))
    ref = _reference(o, t, margin=margin, scale=scale)
    assert jnp.allclose(pred, ref, atol=1e-4, rtol=1e-4), "onehot mismatch"

    print("KERNEL_OK")
</pallas_src>

<mosaic_0001>
module attributes {stable_mosaic.version = 11 : i64} {
  func.func @_aam_dense_kernel(%arg0: i32, %arg1: memref<4x1024xf32, #tpu.memory_space<vmem>>, %arg2: memref<4x1024xf32, #tpu.memory_space<vmem>>, %arg3: memref<4x1024xf32, #tpu.memory_space<vmem>>) attributes {dimension_semantics = [#tpu.dimension_semantics<parallel>], iteration_bounds = array<i64: 1>, scalar_prefetch = 0 : i64, scratch_operands = 0 : i64, tpu.core_type = #tpu.core_type<tc>, window_params = [{transform_indices = @transform_0, window_bounds = array<i64: 4, 1024>}, {transform_indices = @transform_1, window_bounds = array<i64: 4, 1024>}, {transform_indices = @transform_2, window_bounds = array<i64: 4, 1024>}]} {
    %c0 = arith.constant 0 : index
    %c0_0 = arith.constant 0 : index
    %0 = vector.load %arg1[%c0, %c0_0] : memref<4x1024xf32, #tpu.memory_space<vmem>>, vector<4x1024xf32>
    %cst = arith.constant -0.99999988 : f32
    %cst_1 = arith.constant 0.99999988 : f32
    %1 = vector.broadcast %cst : f32 to vector<4x1024xf32>
    %2 = arith.maximumf %1, %0 : vector<4x1024xf32>
    %3 = vector.broadcast %cst_1 : f32 to vector<4x1024xf32>
    %4 = arith.minimumf %3, %2 : vector<4x1024xf32>
    %5 = arith.mulf %4, %4 : vector<4x1024xf32>
    %cst_2 = arith.constant 1.000000e+00 : f32
    %6 = vector.broadcast %cst_2 : f32 to vector<4x1024xf32>
    %7 = arith.subf %6, %5 : vector<4x1024xf32>
    %8 = math.sqrt %7 : vector<4x1024xf32>
    %cst_3 = arith.constant 0.980066597 : f32
    %9 = vector.broadcast %cst_3 : f32 to vector<4x1024xf32>
    %10 = arith.mulf %4, %9 : vector<4x1024xf32>
    %cst_4 = arith.constant 0.198669329 : f32
    %11 = vector.broadcast %cst_4 : f32 to vector<4x1024xf32>
    %12 = arith.mulf %8, %11 : vector<4x1024xf32>
    %13 = arith.subf %10, %12 : vector<4x1024xf32>
    %cst_5 = arith.constant -0.980066597 : f32
    %14 = vector.broadcast %cst_5 : f32 to vector<4x1024xf32>
    %15 = arith.cmpf ogt, %4, %14 : vector<4x1024xf32>
    %cst_6 = arith.constant 0.0397338644 : f32
    %16 = vector.broadcast %cst_6 : f32 to vector<4x1024xf32>
    %17 = arith.subf %4, %16 : vector<4x1024xf32>
    %18 = arith.select %15, %13, %17 : vector<4x1024xi1>, vector<4x1024xf32>
    %c0_7 = arith.constant 0 : index
    %c0_8 = arith.constant 0 : index
    %19 = vector.load %arg2[%c0_7, %c0_8] : memref<4x1024xf32, #tpu.memory_space<vmem>>, vector<4x1024xf32>
    %cst_9 = arith.constant 3.000000e+01 : f32
    %20 = vector.broadcast %cst_9 : f32 to vector<4x1024xf32>
    %21 = arith.mulf %20, %4 : vector<4x1024xf32>
    %22 = arith.subf %18, %4 : vector<4x1024xf32>
    %cst_10 = arith.constant 3.000000e+01 : f32
    %23 = vector.broadcast %cst_10 : f32 to vector<4x1024xf32>
    %24 = arith.mulf %23, %22 : vector<4x1024xf32>
    %25 = arith.mulf %19, %24 : vector<4x1024xf32>
    %26 = arith.addf %21, %25 : vector<4x1024xf32>
    %c0_11 = arith.constant 0 : index
    %c0_12 = arith.constant 0 : index
    %27 = vector.load %arg3[%c0_11, %c0_12] : memref<4x1024xf32, #tpu.memory_space<vmem>>, vector<4x1024xf32>
    tpu.vector_store %arg3[%c0_11, %c0_12], %26 {strides = array<i32>} : memref<4x1024xf32, #tpu.memory_space<vmem>>, vector<4x1024xf32>,
    return
  }
  func.func @transform_0(%arg0: i32) -> (i32, i32) {
    %c0_i32 = arith.constant 0 : i32
    %c0_i32_0 = arith.constant 0 : i32
    return %arg0, %c0_i32 : i32, i32
  }
  func.func @transform_1(%arg0: i32) -> (i32, i32) {
    %c0_i32 = arith.constant 0 : i32
    %c0_i32_0 = arith.constant 0 : i32
    return %arg0, %c0_i32 : i32, i32
  }
  func.func @transform_2(%arg0: i32) -> (i32, i32) {
    %c0_i32 = arith.constant 0 : i32
    %c0_i32_0 = arith.constant 0 : i32
    return %arg0, %c0_i32 : i32, i32
  }
}

</mosaic_0001>

<llo_original>
// kernel: tpu_custom_call.1
$region0: #{tpu_custom_call.1}
  #allocation0 [shape = 'u32[]', space=smem, size = 0x4, offset = 0x4, fixed_abs, tag = 'smem constant byte address 0x4 - core index']
  #allocation1 [shape = 'u32[72,128]{1,0:T(1,128)}', space=vmem, size = 0x9000, scoped, tag = 'internal scratch']
  %s0 = inlined_call_operand.hbm [shape: f32[4,1024], index: 0, kind: input, shape index: {}]
  %s1 = inlined_call_operand.hbm [shape: f32[4,1024], index: 1, kind: input, shape index: {}]
  %s2 = inlined_call_operand.hbm [shape: f32[4,1024], index: 2, kind: output, shape index: {}]
  %s3 = sld [smem:[#allocation0]]
  $region26: #{tpu_custom_call.1} parent=0
    _
  %s5 = ssub.s32 1, %s3
  %s6 = scalar_select 0, %s5, %s3
  $region1: #{tpu_custom_call.1} parent=0
    #allocation2 [shape = 'u8[16384]{0}', space=vmem, size = 0x4000, scoped, tag = 'input window, operand 0, single buffered']
    #allocation3 [shape = 's32[1]{0}', space=sflag, size = 0x4, scoped, tag = 'scoped memory for tpu_custom_call.1']
    #allocation4 [shape = 's32[1]{0}', space=sflag, size = 0x4, scoped, tag = 'scoped memory for tpu_custom_call.1']
    #allocation5 [shape = 'u8[16384]{0}', space=vmem, size = 0x4000, scoped, tag = 'input window, operand 1, single buffered']
    #allocation6 [shape = 's32[1]{0}', space=sflag, size = 0x4, scoped, tag = 'scoped memory for tpu_custom_call.1']
    #allocation7 [shape = 'u8[16384]{0}', space=vmem, size = 0x4000, scoped, tag = 'output window, operand 0, single buffered']
    %7 = vsyncpa [#allocation3], 0
    %8 = vsyncpa [#allocation6], 0
    %9 = vsyncpa [#allocation4], 0
    // Predicated region
    $region2: #{tpu_custom_call.1} parent=1 // pred_check
      _
    $region3: #{tpu_custom_call.1} parent=1 // pred_check_branch
      %11 = sbr.rel (0) target = $region5
    $region4: #{tpu_custom_call.1} parent=1 // pred_region
      %13 = vsyncadd [#allocation3], 0
      %s15 = sshll.u32 %s0, 4
      %s16 = int_to_ptr.hbm [resolvable:$true] %s15
      %s17 = sshll.u32 [#allocation2], 4
      %s18 = int_to_ptr.vmem [resolvable:$true] %s17
      %20 = dma.hbm_to_vmem [thread:$0]  %s16, 512, %s18, [#allocation3]
    $region5: #{tpu_custom_call.1} parent=1 // pred_fallthru
      _
    // Predicated region
    $region6: #{tpu_custom_call.1} parent=1 // pred_check
      _
    $region7: #{tpu_custom_call.1} parent=1 // pred_check_branch
      %22 = sbr.rel (0) target = $region9
    $region8: #{tpu_custom_call.1} parent=1 // pred_region
      %24 = vsyncadd [#allocation6], 0
      %s26 = sshll.u32 %s1, 4
      %s27 = int_to_ptr.hbm [resolvable:$true] %s26
      %s28 = sshll.u32 [#allocation5], 4
      %s29 = int_to_ptr.vmem [resolvable:$true] %s28
      %31 = dma.hbm_to_vmem [thread:$0]  %s27, 512, %s29, [#allocation6]
    $region9: #{tpu_custom_call.1} parent=1 // pred_fallthru
      _
    // Predicated region
    $region10: #{tpu_custom_call.1} parent=1 // pred_check
      _
    $region11: #{tpu_custom_call.1} parent=1 // pred_check_branch
      %33 = sbr.rel (0) target = $region13
    $region12: #{tpu_custom_call.1} parent=1 // pred_region
      %35 = dma.done [#allocation3], 512
    $region13: #{tpu_custom_call.1} parent=1 // pred_fallthru
      _
    // Predicated region
    $region14: #{tpu_custom_call.1} parent=1 // pred_check
      _
    $region15: #{tpu_custom_call.1} parent=1 // pred_check_branch
      %37 = sbr.rel (0) target = $region17
    $region16: #{tpu_custom_call.1} parent=1 // pred_region
      %39 = dma.done [#allocation6], 512
    $region17: #{tpu_custom_call.1} parent=1 // pred_fallthru
      _
    %v40 = vld [vmem:[#allocation2] sm:$0xff]
    %v41 = vld [vmem:[#allocation2 + $0x8] sm:$0xff]
    %v42 = vld [vmem:[#allocation2 + $0x10] sm:$0xff]
    %v43 = vld [vmem:[#allocation2 + $0x18] sm:$0xff]
    %v44 = vmax.f32 %v40, -0.9999999
    %v45 = vmax.f32 %v41, -0.9999999
    %v46 = vmax.f32 %v42, -0.9999999
    %v47 = vmax.f32 %v43, -0.9999999
    %v48 = vmin.f32 %v44, 0.9999999
    %v49 = vmin.f32 %v45, 0.9999999
    %v50 = vmin.f32 %v46, 0.9999999
    %v51 = vmin.f32 %v47, 0.9999999
    %v52 = vmul.f32 %v48, %v48
    %v53 = vmul.f32 %v49, %v49
    %v54 = vmul.f32 %v50, %v50
    %v55 = vmul.f32 %v51, %v51
    %v56 = vsub.f32 1.0, %v52
    %v57 = vsub.f32 1.0, %v53
    %v58 = vsub.f32 1.0, %v54
    %v59 = vsub.f32 1.0, %v55
    %v60 = vrsqrt.pop %v56
    %v61 = vmul.f32 %v60, %v56
    %v62 = vmul.f32 %v61, %v60
    %v63 = vmul.f32 0.5, %v62
    %v64 = vsub.f32 1.5, %v63
    %v65 = vmul.f32 %v60, %v64
    %v66 = vmul.f32 %v56, %v65
    %vm67 = vcmp.eq.f32.partialorder %v56, inf
    %v68 = vsel %vm67, %v56, %v66
    %vm69 = vcmp.eq.f32.partialorder %v56, 0.0
    %v70 = vand.u32 %v56, 2147483648
    %v71 = vsel %vm69, %v70, %v68
    %v72 = vrsqrt.pop %v57
    %v73 = vmul.f32 %v72, %v57
    %v74 = vmul.f32 %v73, %v72
    %v75 = vmul.f32 0.5, %v74
    %v76 = vsub.f32 1.5, %v75
    %v77 = vmul.f32 %v72, %v76
    %v78 = vmul.f32 %v57, %v77
    %vm79 = vcmp.eq.f32.partialorder %v57, inf
    %v80 = vsel %vm79, %v57, %v78
    %vm81 = vcmp.eq.f32.partialorder %v57, 0.0
    %v82 = vand.u32 %v57, 2147483648
    %v83 = vsel %vm81, %v82, %v80
    %v84 = vrsqrt.pop %v58
    %v85 = vmul.f32 %v84, %v58
    %v86 = vmul.f32 %v85, %v84
    %v87 = vmul.f32 0.5, %v86
    %v88 = vsub.f32 1.5, %v87
    %v89 = vmul.f32 %v84, %v88
    %v90 = vmul.f32 %v58, %v89
    %vm91 = vcmp.eq.f32.partialorder %v58, inf
    %v92 = vsel %vm91, %v58, %v90
    %vm93 = vcmp.eq.f32.partialorder %v58, 0.0
    %v94 = vand.u32 %v58, 2147483648
    %v95 = vsel %vm93, %v94, %v92
    %v96 = vrsqrt.pop %v59
    %v97 = vmul.f32 %v96, %v59
    %v98 = vmul.f32 %v97, %v96
    %v99 = vmul.f32 0.5, %v98
    %v100 = vsub.f32 1.5, %v99
    %v101 = vmul.f32 %v96, %v100
    %v102 = vmul.f32 %v59, %v101
    %vm103 = vcmp.eq.f32.partialorder %v59, inf
    %v104 = vsel %vm103, %v59, %v102
    %vm105 = vcmp.eq.f32.partialorder %v59, 0.0
    %v106 = vand.u32 %v59, 2147483648
    %v107 = vsel %vm105, %v106, %v104
    %v108 = vmul.f32 %v48, 0.9800666
    %v109 = vmul.f32 %v49, 0.9800666
    %v110 = vmul.f32 %v50, 0.9800666
    %v111 = vmul.f32 %v51, 0.9800666
    %v112 = vmul.f32 %v71, 0.19866933
    %v113 = vmul.f32 %v83, 0.19866933
    %v114 = vmul.f32 %v95, 0.19866933
    %v115 = vmul.f32 %v107, 0.19866933
    %v116 = vsub.f32 %v108, %v112
    %v117 = vsub.f32 %v109, %v113
    %v118 = vsub.f32 %v110, %v114
    %v119 = vsub.f32 %v111, %v115
    %vm120 = vcmp.gt.f32.partialorder %v48, -0.9800666
    %vm121 = vcmp.gt.f32.partialorder %v49, -0.9800666
    %vm122 = vcmp.gt.f32.partialorder %v50, -0.9800666
    %vm123 = vcmp.gt.f32.partialorder %v51, -0.9800666
    %v124 = vsub.f32 %v48, 0.039733864
    %v125 = vsub.f32 %v49, 0.039733864
    %v126 = vsub.f32 %v50, 0.039733864
    %v127 = vsub.f32 %v51, 0.039733864
    %v128 = vsel %vm120, %v116, %v124
    %v129 = vsel %vm121, %v117, %v125
    %v130 = vsel %vm122, %v118, %v126
    %v131 = vsel %vm123, %v119, %v127
    %v132 = vld [vmem:[#allocation5] sm:$0xff]
    %v133 = vld [vmem:[#allocation5 + $0x8] sm:$0xff]
    %v134 = vld [vmem:[#allocation5 + $0x10] sm:$0xff]
    %v135 = vld [vmem:[#allocation5 + $0x18] sm:$0xff]
    %v136 = vmul.f32 %v48, 30.0
    %v137 = vmul.f32 %v49, 30.0
    %v138 = vmul.f32 %v50, 30.0
    %v139 = vmul.f32 %v51, 30.0
    %v140 = vsub.f32 %v128, %v48
    %v141 = vsub.f32 %v129, %v49
    %v142 = vsub.f32 %v130, %v50
    %v143 = vsub.f32 %v131, %v51
    %v144 = vmul.f32 %v140, 30.0
    %v145 = vmul.f32 %v141, 30.0
    %v146 = vmul.f32 %v142, 30.0
    %v147 = vmul.f32 %v143, 30.0
    %v148 = vmul.f32 %v132, %v144
    %v149 = vmul.f32 %v133, %v145
    %v150 = vmul.f32 %v134, %v146
    %v151 = vmul.f32 %v135, %v147
    %v152 = vadd.f32 %v136, %v148
    %v153 = vadd.f32 %v137, %v149
    %v154 = vadd.f32 %v138, %v150
    %v155 = vadd.f32 %v139, %v151
    %156 = vst [vmem:[#allocation7] sm:$0xff] %v152
    %157 = vst [vmem:[#allocation7 + $0x8] sm:$0xff] %v153
    %158 = vst [vmem:[#allocation7 + $0x10] sm:$0xff] %v154
    %159 = vst [vmem:[#allocation7 + $0x18] sm:$0xff] %v155
    // Predicated region
    $region18: #{tpu_custom_call.1} parent=1 // pred_check
      _
    $region19: #{tpu_custom_call.1} parent=1 // pred_check_branch
      %161 = sbr.rel (0) target = $region21
    $region20: #{tpu_custom_call.1} parent=1 // pred_region
      %163 = vsyncadd [#allocation4], 0
      %s165 = sshll.u32 [#allocation7], 4
      %s166 = int_to_ptr.vmem [resolvable:$true] %s165
      %s167 = sshll.u32 %s2, 4
      %s168 = int_to_ptr.hbm [resolvable:$true] %s167
      %170 = dma.vmem_to_hbm [thread:$0]  %s166, 512, %s168, [#allocation4]
    $region21: #{tpu_custom_call.1} parent=1 // pred_fallthru
      _
    // Predicated region
    $region22: #{tpu_custom_call.1} parent=1 // pred_check
      _
    $region23: #{tpu_custom_call.1} parent=1 // pred_check_branch
      %172 = sbr.rel (0) target = $region25
    $region24: #{tpu_custom_call.1} parent=1 // pred_region
      %174 = dma.done [#allocation4], 512
    $region25: #{tpu_custom_call.1} parent=1 // pred_fallthru
      _
    %175 = vsyncpa [#allocation3], 1
    %176 = vsyncpa [#allocation6], 1
    %177 = vsyncpa [#allocation4], 1

</llo_original>
